<compile_context>
chip_gen: v5e
topology: v5e:2x2
jax: 0.10.0
libtpu: 0.0.40
codegen_flags: <defaults>
</compile_context>

<pallas_src>
import jax
import jax.numpy as jnp
from jax.experimental import pallas as pl
from jax.experimental.pallas import tpu as pltpu

OUT_DIM = 4    # true output width (.view(-1, 4))
OUT_PAD = 128  # lane-dense padded width for the final (40 -> 4) layer


def qnet_kernel(x_ref, w1_ref, b1_ref, w2_ref, b2_ref, w3_ref, b3_ref, o_ref):
    # Whole problem fits in one VMEM tile (tiny MLP) -> single grid point.
    x = x_ref[...]                                                  # (B, 16)
    B = x.shape[0]

    # linear1: (B,16) @ (16,20) + (1,20)
    h1 = jnp.dot(x, w1_ref[...], preferred_element_type=jnp.float32) + b1_ref[...]

    # PyTorch-quirk normalization (full-tensor sums, divisor 20 regardless of B):
    #   x_avg = sum(h1) / 20 ; x_std = sum((h1 - x_avg)^2) / 20
    # Rewritten so the two reductions are independent (overlap in the XLU):
    #   sum((h1 - s1/20)^2) = s2 - s1^2/10 + B*s1^2/20
    s1 = jnp.sum(h1)                         # reduce #1
    s2 = jnp.sum(h1 * h1)                    # reduce #2 (independent of s1)
    x_avg = s1 * 0.05
    x_std = (s2 + (B * 0.05 - 0.1) * (s1 * s1)) * 0.05
    epsilon = 1e-07
    inv = 1.0 / (jnp.sqrt(x_std) + epsilon)  # single scalar reciprocal
    h1t = jnp.tanh((h1 - x_avg) * inv)       # broadcast multiply, no vector divide

    # linear2 + tanh: (B,20) @ (20,40) + (1,40)
    h2 = jnp.tanh(
        jnp.dot(h1t, w2_ref[...], preferred_element_type=jnp.float32) + b2_ref[...]
    )                                                               # (B, 40)

    # linear3, zero-padded to 128 lanes for an unmasked lane-dense store:
    # (B,40) @ (40,128) + (1,128); columns 4..127 are exactly zero.
    o_ref[...] = (
        jnp.dot(h2, w3_ref[...], preferred_element_type=jnp.float32) + b3_ref[...]
    )


def prepare_params(params):
    """One-time layout plumbing: pad the final layer to 128 output lanes so the
    kernel's store is unmasked/lane-dense. Done outside the forward hot path."""
    w1, b1, w2, b2, w3, b3 = params
    w3p = jnp.zeros((w3.shape[0], OUT_PAD), jnp.float32).at[:, : w3.shape[1]].set(w3)
    b3p = jnp.zeros((1, OUT_PAD), jnp.float32).at[:, : b3.shape[1]].set(b3)
    return (w1, b1, w2, b2, w3p, b3p)


@jax.jit
def q_net_forward(x, prepared_params):
    w1, b1, w2, b2, w3p, b3p = prepared_params
    B = x.shape[0]

    vmem = pl.BlockSpec(memory_space=pltpu.MemorySpace.VMEM)
    out = pl.pallas_call(
        qnet_kernel,
        out_shape=jax.ShapeDtypeStruct((B, OUT_PAD), jnp.float32),
        in_specs=[vmem] * 7,
        out_specs=vmem,
    )(x, w1, b1, w2, b2, w3p, b3p)

    # .view(-1, 4) in the reference; here: drop the zero padding.
    return out[:, :OUT_DIM]


def init_params(key):
    # Deterministic synthetic parameters (PyTorch-default-like uniform ranges).
    k1, k2, k3, k4, k5, k6 = jax.random.split(key, 6)

    def u(k, shape, fan_in):
        bound = 1.0 / jnp.sqrt(fan_in)
        return jax.random.uniform(k, shape, jnp.float32, -bound, bound)

    w1 = u(k1, (16, 20), 16.0)
    b1 = u(k2, (1, 20), 16.0)
    w2 = u(k3, (20, 40), 20.0)
    b2 = u(k4, (1, 40), 20.0)
    w3 = u(k5, (40, 4), 40.0)
    b3 = u(k6, (1, 4), 40.0)
    return (w1, b1, w2, b2, w3, b3)


def q_net_ref(x, params):
    # Pure-JAX reference replicating the PyTorch forward exactly (original
    # serial formulation) for verification.
    w1, b1, w2, b2, w3, b3 = params
    h1 = x @ w1 + b1
    x_avg = jnp.sum(h1) / 20.0
    xm = h1 - x_avg
    x_std = jnp.sum(xm * xm) / 20.0
    x_norm = xm / (jnp.sqrt(x_std) + 1e-07)
    h1t = jnp.tanh(x_norm)
    h2 = jnp.tanh(h1t @ w2 + b2)
    out = h2 @ w3 + b3
    return out.reshape(-1, 4)


if __name__ == "__main__":
    key = jax.random.PRNGKey(0)
    kp, kx = jax.random.split(key)

    params = init_params(kp)
    prepared = prepare_params(params)

    # Frozen Lake state is a 16-dim one-hot-ish vector; use batch=2.
    B = 2
    x = jax.random.normal(kx, (B, 16), jnp.float32)

    out = q_net_forward(x, prepared)
    out = jax.block_until_ready(out)

    ref = q_net_ref(x, params)
    assert out.shape == (B, OUT_DIM)
    # 1e-4 tolerance: the variance is computed in an algebraically-reordered
    # (decoupled-reduction) form, so rounding differs from the reference by a
    # few ULPs that get slightly amplified through layers 2/3.
    assert jnp.allclose(out, ref, atol=1e-4, rtol=1e-4)

    print("KERNEL_OK")
</pallas_src>

<mosaic_0001>
module attributes {stable_mosaic.version = 11 : i64} {
  func.func @qnet_kernel(%arg0: memref<2x16xf32, #tpu.memory_space<vmem>>, %arg1: memref<16x20xf32, #tpu.memory_space<vmem>>, %arg2: memref<1x20xf32, #tpu.memory_space<vmem>>, %arg3: memref<20x40xf32, #tpu.memory_space<vmem>>, %arg4: memref<1x40xf32, #tpu.memory_space<vmem>>, %arg5: memref<40x128xf32, #tpu.memory_space<vmem>>, %arg6: memref<1x128xf32, #tpu.memory_space<vmem>>, %arg7: memref<2x128xf32, #tpu.memory_space<vmem>>) attributes {dimension_semantics = [], scalar_prefetch = 0 : i64, scratch_operands = 0 : i64, tpu.core_type = #tpu.core_type<tc>} {
    %c0 = arith.constant 0 : index
    %c0_0 = arith.constant 0 : index
    %0 = vector.load %arg0[%c0, %c0_0] : memref<2x16xf32, #tpu.memory_space<vmem>>, vector<2x16xf32>
    %c0_1 = arith.constant 0 : index
    %c0_2 = arith.constant 0 : index
    %1 = vector.load %arg1[%c0_1, %c0_2] : memref<16x20xf32, #tpu.memory_space<vmem>>, vector<16x20xf32>
    %cst = arith.constant dense<0.000000e+00> : vector<2x20xf32>
    %2 = tpu.matmul %0, %1, %cst {dimension_numbers = #tpu.dot_dimension_numbers<[1], [0], [0], [1], [0, 0, 1, 1], [], []>} : vector<2x16xf32>, vector<16x20xf32>, vector<2x20xf32> -> vector<2x20xf32>
    %c0_3 = arith.constant 0 : index
    %c0_4 = arith.constant 0 : index
    %3 = vector.load %arg2[%c0_3, %c0_4] : memref<1x20xf32, #tpu.memory_space<vmem>>, vector<1x20xf32>
    %4 = vector.broadcast %3 : vector<1x20xf32> to vector<2x20xf32>
    %5 = arith.addf %2, %4 : vector<2x20xf32>
    %6 = vector.shape_cast %5 : vector<2x20xf32> to vector<1x2x20xf32>
    %cst_5 = arith.constant dense<0.000000e+00> : vector<1xf32>
    %7 = vector.multi_reduction <add>, %6, %cst_5 [1, 2] : vector<1x2x20xf32> to vector<1xf32>
    %8 = vector.shape_cast %7 : vector<1xf32> to vector<1x1x1xf32>
    %9 = vector.extract %8[0, 0, 0] : f32 from vector<1x1x1xf32>
    %10 = arith.mulf %5, %5 : vector<2x20xf32>
    %11 = vector.shape_cast %10 : vector<2x20xf32> to vector<1x2x20xf32>
    %cst_6 = arith.constant dense<0.000000e+00> : vector<1xf32>
    %12 = vector.multi_reduction <add>, %11, %cst_6 [1, 2] : vector<1x2x20xf32> to vector<1xf32>
    %13 = vector.shape_cast %12 : vector<1xf32> to vector<1x1x1xf32>
    %14 = vector.extract %13[0, 0, 0] : f32 from vector<1x1x1xf32>
    %cst_7 = arith.constant 5.000000e-02 : f32
    %15 = arith.mulf %9, %cst_7 : f32
    %16 = arith.mulf %9, %9 : f32
    %cst_8 = arith.constant 0.000000e+00 : f32
    %17 = arith.mulf %cst_8, %16 : f32
    %18 = arith.addf %14, %17 : f32
    %cst_9 = arith.constant 5.000000e-02 : f32
    %19 = arith.mulf %18, %cst_9 : f32
    %20 = math.sqrt %19 : f32
    %cst_10 = arith.constant 1.000000e-07 : f32
    %21 = arith.addf %20, %cst_10 : f32
    %cst_11 = arith.constant 1.000000e+00 : f32
    %22 = arith.divf %cst_11, %21 : f32
    %23 = vector.broadcast %15 : f32 to vector<2x20xf32>
    %24 = arith.subf %5, %23 : vector<2x20xf32>
    %25 = vector.broadcast %22 : f32 to vector<2x20xf32>
    %26 = arith.mulf %24, %25 : vector<2x20xf32>
    %27 = math.tanh %26 : vector<2x20xf32>
    %c0_12 = arith.constant 0 : index
    %c0_13 = arith.constant 0 : index
    %28 = vector.load %arg3[%c0_12, %c0_13] : memref<20x40xf32, #tpu.memory_space<vmem>>, vector<20x40xf32>
    %cst_14 = arith.constant dense<0.000000e+00> : vector<2x40xf32>
    %29 = tpu.matmul %27, %28, %cst_14 {dimension_numbers = #tpu.dot_dimension_numbers<[1], [0], [0], [1], [0, 0, 1, 1], [], []>} : vector<2x20xf32>, vector<20x40xf32>, vector<2x40xf32> -> vector<2x40xf32>
    %c0_15 = arith.constant 0 : index
    %c0_16 = arith.constant 0 : index
    %30 = vector.load %arg4[%c0_15, %c0_16] : memref<1x40xf32, #tpu.memory_space<vmem>>, vector<1x40xf32>
    %31 = vector.broadcast %30 : vector<1x40xf32> to vector<2x40xf32>
    %32 = arith.addf %29, %31 : vector<2x40xf32>
    %33 = math.tanh %32 : vector<2x40xf32>
    %c0_17 = arith.constant 0 : index
    %c0_18 = arith.constant 0 : index
    %34 = vector.load %arg5[%c0_17, %c0_18] : memref<40x128xf32, #tpu.memory_space<vmem>>, vector<40x128xf32>
    %cst_19 = arith.constant dense<0.000000e+00> : vector<2x128xf32>
    %35 = tpu.matmul %33, %34, %cst_19 {dimension_numbers = #tpu.dot_dimension_numbers<[1], [0], [0], [1], [0, 0, 1, 1], [], []>} : vector<2x40xf32>, vector<40x128xf32>, vector<2x128xf32> -> vector<2x128xf32>
    %c0_20 = arith.constant 0 : index
    %c0_21 = arith.constant 0 : index
    %36 = vector.load %arg6[%c0_20, %c0_21] : memref<1x128xf32, #tpu.memory_space<vmem>>, vector<1x128xf32>
    %37 = vector.broadcast %36 : vector<1x128xf32> to vector<2x128xf32>
    %38 = arith.addf %35, %37 : vector<2x128xf32>
    %c0_22 = arith.constant 0 : index
    %c0_23 = arith.constant 0 : index
    %39 = vector.load %arg7[%c0_22, %c0_23] : memref<2x128xf32, #tpu.memory_space<vmem>>, vector<2x128xf32>
    tpu.vector_store %arg7[%c0_22, %c0_23], %38 {strides = array<i32>} : memref<2x128xf32, #tpu.memory_space<vmem>>, vector<2x128xf32>,
    return
  }
}

</mosaic_0001>

<llo_original>
// kernel: q_net_forward.1
$region0: #{q_net_forward.1}
  #allocation0 [shape = 'u32[]', space=smem, size = 0x4, offset = 0x4, fixed_abs, tag = 'smem constant byte address 0x4 - core index']
  #allocation1 [shape = 'u32[72,128]{1,0:T(1,128)}', space=vmem, size = 0x9000, scoped, tag = 'internal scratch']
  %s0 = inlined_call_operand.hbm [shape: f32[2,16], index: 0, kind: input, shape index: {}]
  %s1 = inlined_call_operand.hbm [shape: f32[16,20], index: 1, kind: input, shape index: {}]
  %s2 = inlined_call_operand.vmem [shape: f32[1,20], index: 2, kind: input, shape index: {}]
  %s3 = inlined_call_operand.hbm [shape: f32[20,40], index: 3, kind: input, shape index: {}]
  %s4 = inlined_call_operand.vmem [shape: f32[1,40], index: 4, kind: input, shape index: {}]
  %s5 = inlined_call_operand.hbm [shape: f32[40,128], index: 5, kind: input, shape index: {}]
  %s6 = inlined_call_operand.vmem [shape: f32[1,128], index: 6, kind: input, shape index: {}]
  %s7 = inlined_call_operand.hbm [shape: f32[2,128], index: 7, kind: output, shape index: {}]
  %s8 = sld [smem:[#allocation0]]
  $region54: #{q_net_forward.1} parent=0
    _
  %s10 = ssub.s32 1, %s8
  %s11 = scalar_select 0, %s10, %s8
  $region1: #{q_net_forward.1} parent=0
    #allocation2 [shape = 'u8[1024]{0}', space=vmem, size = 0x400, scoped, tag = 'input window, operand 0, single buffered']
    #allocation3 [shape = 's32[1]{0}', space=sflag, size = 0x4, scoped, tag = 'scoped memory for q_net_forward.1']
    #allocation4 [shape = 's32[1]{0}', space=sflag, size = 0x4, scoped, tag = 'scoped memory for q_net_forward.1']
    #allocation5 [shape = 'u8[8192]{0}', space=vmem, size = 0x2000, scoped, tag = 'input window, operand 1, single buffered']
    #allocation6 [shape = 's32[1]{0}', space=sflag, size = 0x4, scoped, tag = 'scoped memory for q_net_forward.1']
    #allocation7 [shape = 'u8[12288]{0}', space=vmem, size = 0x3000, scoped, tag = 'input window, operand 3, single buffered']
    #allocation8 [shape = 'u8[20480]{0}', space=vmem, size = 0x5000, scoped, tag = 'input window, operand 5, single buffered']
    #allocation9 [shape = 's32[1]{0}', space=sflag, size = 0x4, scoped, tag = 'scoped memory for q_net_forward.1']
    #allocation10 [shape = 'u8[1024]{0}', space=vmem, size = 0x400, scoped, tag = 'output window, operand 0, single buffered']
    %12 = vsyncpa [#allocation3], 0
    %13 = vsyncpa [#allocation6], 0
    %14 = vsyncpa [#allocation9], 0
    %15 = vsyncpa [#allocation4], 0
    // Predicated region
    $region2: #{q_net_forward.1} parent=1 // pred_check
      _
    $region3: #{q_net_forward.1} parent=1 // pred_check_branch
      %17 = sbr.rel (0) target = $region5
    $region4: #{q_net_forward.1} parent=1 // pred_region
      %19 = vsyncadd [#allocation3], 0
      %s21 = sshll.u32 %s0, 4
      %s22 = int_to_ptr.hbm [resolvable:$true] %s21
      %s23 = sshll.u32 [#allocation2], 4
      %s24 = int_to_ptr.vmem [resolvable:$true] %s23
      %26 = dma.hbm_to_vmem [thread:$0]  %s22, 32, %s24, [#allocation3]
    $region5: #{q_net_forward.1} parent=1 // pred_fallthru
      _
    // Predicated region
    $region6: #{q_net_forward.1} parent=1 // pred_check
      _
    $region7: #{q_net_forward.1} parent=1 // pred_check_branch
      %28 = sbr.rel (0) target = $region9
    $region8: #{q_net_forward.1} parent=1 // pred_region
      %30 = vsyncadd [#allocation6], 0
      %s31 = sshll.u32 %s1, 4
      %s32 = int_to_ptr.hbm [resolvable:$true] %s31
      %s33 = sshll.u32 [#allocation5], 4
      %s34 = int_to_ptr.vmem [resolvable:$true] %s33
      %39 = dma.hbm_to_vmem [thread:$0]  %s32, 256, %s34, [#allocation6], 128, 128, 8
    $region9: #{q_net_forward.1} parent=1 // pred_fallthru
      _
    // Predicated region
    $region10: #{q_net_forward.1} parent=1 // pred_check
      _
    $region11: #{q_net_forward.1} parent=1 // pred_check_branch
      %41 = sbr.rel (0) target = $region13
    $region12: #{q_net_forward.1} parent=1 // pred_region
      _
    $region13: #{q_net_forward.1} parent=1 // pred_fallthru
      _
    // Predicated region
    $region14: #{q_net_forward.1} parent=1 // pred_check
      _
    $region15: #{q_net_forward.1} parent=1 // pred_check_branch
      %43 = sbr.rel (0) target = $region17
    $region16: #{q_net_forward.1} parent=1 // pred_region
      %45 = vsyncadd [#allocation6], 0
      %s46 = sshll.u32 %s3, 4
      %s47 = int_to_ptr.hbm [resolvable:$true] %s46
      %s48 = sshll.u32 [#allocation7], 4
      %s49 = int_to_ptr.vmem [resolvable:$true] %s48
      %54 = dma.hbm_to_vmem [thread:$0]  %s47, 384, %s49, [#allocation6], 128, 128, 8
    $region17: #{q_net_forward.1} parent=1 // pred_fallthru
      _
    // Predicated region
    $region18: #{q_net_forward.1} parent=1 // pred_check
      _
    $region19: #{q_net_forward.1} parent=1 // pred_check_branch
      %56 = sbr.rel (0) target = $region21
    $region20: #{q_net_forward.1} parent=1 // pred_region
      _
    $region21: #{q_net_forward.1} parent=1 // pred_fallthru
      _
    // Predicated region
    $region22: #{q_net_forward.1} parent=1 // pred_check
      _
    $region23: #{q_net_forward.1} parent=1 // pred_check_branch
      %58 = sbr.rel (0) target = $region25
    $region24: #{q_net_forward.1} parent=1 // pred_region
      %60 = vsyncadd [#allocation9], 0
      %s61 = sshll.u32 %s5, 4
      %s62 = int_to_ptr.hbm [resolvable:$true] %s61
      %s63 = sshll.u32 [#allocation8], 4
      %s64 = int_to_ptr.vmem [resolvable:$true] %s63
      %69 = dma.hbm_to_vmem [thread:$0]  %s62, 640, %s64, [#allocation9], 128, 128, 8
    $region25: #{q_net_forward.1} parent=1 // pred_fallthru
      _
    // Predicated region
    $region26: #{q_net_forward.1} parent=1 // pred_check
      _
    $region27: #{q_net_forward.1} parent=1 // pred_check_branch
      %71 = sbr.rel (0) target = $region29
    $region28: #{q_net_forward.1} parent=1 // pred_region
      _
    $region29: #{q_net_forward.1} parent=1 // pred_fallthru
      _
    // Predicated region
    $region30: #{q_net_forward.1} parent=1 // pred_check
      _
    $region31: #{q_net_forward.1} parent=1 // pred_check_branch
      %73 = sbr.rel (0) target = $region33
    $region32: #{q_net_forward.1} parent=1 // pred_region
      %75 = dma.done [#allocation3], 32
    $region33: #{q_net_forward.1} parent=1 // pred_fallthru
      _
    // Predicated region
    $region34: #{q_net_forward.1} parent=1 // pred_check
      _
    $region35: #{q_net_forward.1} parent=1 // pred_check_branch
      %77 = sbr.rel (0) target = $region37
    $region36: #{q_net_forward.1} parent=1 // pred_region
      %79 = dma.done [#allocation6], 256
    $region37: #{q_net_forward.1} parent=1 // pred_fallthru
      _
    // Predicated region
    $region38: #{q_net_forward.1} parent=1 // pred_check
      _
    $region39: #{q_net_forward.1} parent=1 // pred_check_branch
      %81 = sbr.rel (0) target = $region41
    $region40: #{q_net_forward.1} parent=1 // pred_region
      %83 = dma.done [#allocation6], 384
    $region41: #{q_net_forward.1} parent=1 // pred_fallthru
      _
    // Predicated region
    $region42: #{q_net_forward.1} parent=1 // pred_check
      _
    $region43: #{q_net_forward.1} parent=1 // pred_check_branch
      %85 = sbr.rel (0) target = $region45
    $region44: #{q_net_forward.1} parent=1 // pred_region
      %87 = dma.done [#allocation9], 640
    $region45: #{q_net_forward.1} parent=1 // pred_fallthru
      _
    %v88 = vld [vmem:[#allocation2] sm:$0x3]
    %v89 = vld [vmem:[#allocation5] sm:$0xff]
    %v90 = vld [vmem:[#allocation5 + $0x8] sm:$0xff]
    %v91 = vld [vmem:[%s2] sm:$0x1]
    %v93 = vperm.slane %v91, 0
    %vm95 = vcmask 130048
    %v97 = vsel %vm95, %v88, 0
    %99 = vmatpush.msra.mxu0 0.0
    %100 = vmatpush.msra.mxu0 0.0
    %101 = vmatpush.msra.mxu0 0.0
    %102 = vmatpush.msra.mxu0 0.0
    %103 = vmatpush.msra.mxu0 0.0
    %104 = vmatpush.msra.mxu0 0.0
    %105 = vmatpush.msra.mxu0 0.0
    %106 = vmatpush.msra.mxu0 0.0
    %107 = vmatpush.msra.mxu0 0.0
    %108 = vmatpush.msra.mxu0 0.0
    %109 = vmatpush.msra.mxu0 0.0
    %110 = vmatpush.msra.mxu0 0.0
    %111 = vmatpush.msra.mxu0 0.0
    %112 = vmatpush.msra.mxu0 0.0
    %113 = vmatpush.msra.mxu0 %v90
    %114 = vmatpush.msra.mxu0 %v89
    %115 = vmatmul.f32.gmra.mxu0 %v97
    %v116 = vpop.f32.mrf.mxu0
    %v117 = vadd.f32 %v93, %v116
    %118 = vdwg.mxu0
    %vm119 = vcmask 156672
    %v120 = vsel %vm119, %v117, 0.0
    %121 = vadd.xlane.f32.xlu0 %v120
    %v122 = vpop.xlane.xlu0 %121
    %v123 = vrot.slane %v122, 4
    %v124 = vadd.f32 %v122, %v123
    %v125 = vrot.slane %v124, 2
    %v126 = vadd.f32 %v124, %v125
    %v127 = vrot.slane %v126, 1
    %v128 = vadd.f32 %v126, %v127
    %s129 = vtos %v128
    %v130 = vmul.f32 %v117, %v117
    %v131 = vsel %vm119, %v130, 0.0
    %132 = vadd.xlane.f32.xlu0 %v131
    %v133 = vpop.xlane.xlu0 %132
    %v134 = vrot.slane %v133, 4
    %v135 = vadd.f32 %v133, %v134
    %v136 = vrot.slane %v135, 2
    %v137 = vadd.f32 %v135, %v136
    %v138 = vrot.slane %v137, 1
    %v139 = vadd.f32 %v137, %v138
    %s140 = vtos %v139
    %s141 = smul.f32 %s129, 0.05
    %s142 = smul.f32 %s129, %s129
    %s143 = smul.f32 %s142, 0.0
    %s144 = sadd.f32 %s140, %s143
    %s145 = smul.f32 %s144, 0.05
    %v146 = vstv %s145
    %v147 = vrsqrt.pop %v146
    %v148 = vmul.f32 %v147, %v146
    %v149 = vmul.f32 %v148, %v147
    %v150 = vmul.f32 0.5, %v149
    %v151 = vsub.f32 1.5, %v150
    %v152 = vmul.f32 %v147, %v151
    %v153 = vmul.f32 %v146, %v152
    %vm154 = vcmp.eq.f32.partialorder %v146, inf
    %v155 = vsel %vm154, %v146, %v153
    %vm156 = vcmp.eq.f32.partialorder %v146, 0.0
    %v157 = vand.u32 %v146, 2147483648
    %v158 = vsel %vm156, %v157, %v155
    %s159 = vtos %v158
    %s160 = sadd.f32 %s159, 1e-07
    %v161 = vstv %s160
    %v162 = vrcp.pop %v161
    %v163 = vmul.f32 %v161, %v162
    %v164 = vsub.f32 1.0, %v163
    %v165 = vmul.f32 %v162, %v164
    %v166 = vadd.f32 %v162, %v165
    %vm167 = vweird.f32 %v161
    %vm168 = vweird.f32 %v162
    %vm169 = vmor %vm167, %vm168
    %v170 = vsel %vm169, %v162, %v166
    %v171 = vand.u32 2147483647, %v161
    %vm172 = vcmp.eq.f32.partialorder %v171, 8.507059e+37
    %v173 = vand.u32 %v161, 2147483648
    %v174 = vor.u32 1.1754944e-38, %v173
    %v175 = vsel %vm172, %v174, %v170
    %s176 = vtos %v175
    %v177 = vstv %s141
    %v178 = vsub.f32 %v117, %v177
    %v179 = vstv %s176
    %v180 = vmul.f32 %v178, %v179
    %v181 = vtanh.pop %v180
    %v182 = vld [vmem:[#allocation7] sm:$0xff]
    %v183 = vld [vmem:[#allocation7 + $0x8] sm:$0xff]
    %v184 = vld [vmem:[#allocation7 + $0x10] sm:$0xf]
    %v185 = vld [vmem:[%s4] sm:$0x1]
    %v187 = vperm.slane %v185, 0
    %vm189 = vcmask 162816
    %v191 = vsel %vm189, %v181, 0
    %vm193 = vcmask 1043456
    %v195 = vsel %vm193, %v184, 0
    %197 = vmatpush.msra.mxu0 0.0
    %198 = vmatpush.msra.mxu0 0.0
    %199 = vmatpush.msra.mxu0 0.0
    %200 = vmatpush.msra.mxu0 0.0
    %201 = vmatpush.msra.mxu0 0.0
    %202 = vmatpush.msra.mxu0 0.0
    %203 = vmatpush.msra.mxu0 0.0
    %204 = vmatpush.msra.mxu0 0.0
    %205 = vmatpush.msra.mxu0 0.0
    %206 = vmatpush.msra.mxu0 0.0
    %207 = vmatpush.msra.mxu0 0.0
    %208 = vmatpush.msra.mxu0 0.0
    %209 = vmatpush.msra.mxu0 0.0
    %210 = vmatpush.msra.mxu0 %v195
    %211 = vmatpush.msra.mxu0 %v183
    %212 = vmatpush.msra.mxu0 %v182
    %213 = vmatmul.f32.gmra.mxu0 %v191
    %v214 = vpop.f32.mrf.mxu0
    %v215 = vadd.f32 %v187, %v214
    %216 = vdwg.mxu0
    %v217 = vtanh.pop %v215
    %v218 = vld [vmem:[#allocation8] sm:$0xff]
    %v219 = vld [vmem:[#allocation8 + $0x8] sm:$0xff]
    %v220 = vld [vmem:[#allocation8 + $0x10] sm:$0xff]
    %v221 = vld [vmem:[#allocation8 + $0x18] sm:$0xff]
    %v222 = vld [vmem:[#allocation8 + $0x20] sm:$0xff]
    %v223 = vld [vmem:[%s6] sm:$0x1]
    %v225 = vperm.slane %v223, 0
    %vm227 = vcmask 326656
    %v229 = vsel %vm227, %v217, 0
    %231 = vmatpush.msra.mxu0 0.0
    %232 = vmatpush.msra.mxu0 0.0
    %233 = vmatpush.msra.mxu0 0.0
    %234 = vmatpush.msra.mxu0 0.0
    %235 = vmatpush.msra.mxu0 0.0
    %236 = vmatpush.msra.mxu0 0.0
    %237 = vmatpush.msra.mxu0 0.0
    %238 = vmatpush.msra.mxu0 0.0
    %239 = vmatpush.msra.mxu0 0.0
    %240 = vmatpush.msra.mxu0 0.0
    %241 = vmatpush.msra.mxu0 0.0
    %242 = vmatpush.msra.mxu0 %v222
    %243 = vmatpush.msra.mxu0 %v221
    %244 = vmatpush.msra.mxu0 %v220
    %245 = vmatpush.msra.mxu0 %v219
    %246 = vmatpush.msra.mxu0 %v218
    %247 = vmatmul.f32.gmra.mxu0 %v229
    %v248 = vpop.f32.mrf.mxu0
    %v249 = vadd.f32 %v225, %v248
    %250 = vdwg.mxu0
    %251 = vst [vmem:[#allocation10] sm:$0x3] %v249
    // Predicated region
    $region46: #{q_net_forward.1} parent=1 // pred_check
      _
    $region47: #{q_net_forward.1} parent=1 // pred_check_branch
      %253 = sbr.rel (0) target = $region49
    $region48: #{q_net_forward.1} parent=1 // pred_region
      %255 = vsyncadd [#allocation4], 0
      %s257 = sshll.u32 [#allocation10], 4
      %s258 = int_to_ptr.vmem [resolvable:$true] %s257
      %s259 = sshll.u32 %s7, 4
      %s260 = int_to_ptr.hbm [resolvable:$true] %s259
      %262 = dma.vmem_to_hbm [thread:$0]  %s258, 32, %s260, [#allocation4]
    $region49: #{q_net_forward.1} parent=1 // pred_fallthru
      _
    // Predicated region
    $region50: #{q_net_forward.1} parent=1 // pred_check
      _
    $region51: #{q_net_forward.1} parent=1 // pred_check_branch
      %264 = sbr.rel (0) target = $region53
    $region52: #{q_net_forward.1} parent=1 // pred_region
      %266 = dma.done [#allocation4], 32
    $region53: #{q_net_forward.1} parent=1 // pred_fallthru
      _
    %267 = vsyncpa [#allocation3], 1
    %268 = vsyncpa [#allocation6], 1
    %269 = vsyncpa [#allocation9], 1
    %270 = vsyncpa [#allocation4], 1

</llo_original>
